<compile_context>
chip_gen: v7x
topology: tpu7x:2x2x1
jax: 0.10.0
libtpu: 0.0.40
codegen_flags: <defaults>
</compile_context>

<pallas_src>
import jax
import jax.numpy as jnp
from jax.experimental import pallas as pl
from jax.experimental.pallas import tpu as pltpu

BN_EPS = 1e-5          # PyTorch BatchNorm1d default eps
IN_FEATURES = 4
K_PAD = 8              # fc1 contraction dim padded 4 -> 8 (sublane-aligned MXU path)
HIDDEN = 256
N_ACTIONS = 2
OUT_PAD = 8            # fc2 output rows padded 2 -> 8 (sublane-aligned)
LANE = 128


def _round_up(x, m):
    return (x + m - 1) // m * m


def dqn_kernel(xT_ref, w1T_ref, b1T_ref, w2T_ref, b2T_ref, outT_ref):
    # xT:   [K_PAD, TB]       observations, batch lane-dense
    # w1T:  [HIDDEN, K_PAD]   fc1 weight with BN(eval) scale folded in
    # b1T:  [HIDDEN, 1]       fc1 bias with BN(eval) shift folded in
    # w2T:  [OUT_PAD, HIDDEN] fc2 weight (rows 2..7 zero)
    # b2T:  [OUT_PAD, 1]      fc2 bias   (rows 2..7 zero)
    # outT: [OUT_PAD, TB]     Q-values transposed (2 useful sublanes)
    hT = jnp.dot(w1T_ref[...], xT_ref[...],
                 preferred_element_type=jnp.float32)          # [HIDDEN, TB] (MXU)
    hT = jnp.maximum(hT + b1T_ref[...], 0.0)                  # fused bias + ReLU
    outT_ref[...] = (
        jnp.dot(w2T_ref[...], hT, preferred_element_type=jnp.float32)  # MXU
        + b2T_ref[...]
    )


def prepare_params(params):
    """One-time prep: fold BN(eval)+bias into fc1, transpose, sublane-pad.

    Called once outside the RL step loop, so the per-call path is just the
    pallas_call.
    """
    w1, b1, gamma, beta, run_mean, run_var, w2, b2 = params
    scale = gamma * jax.lax.rsqrt(run_var + BN_EPS)                 # [256]
    w1_fused = w1 * scale[:, None]                                  # [256, 4]
    w1T = jnp.zeros((HIDDEN, K_PAD), jnp.float32).at[:, :IN_FEATURES].set(w1_fused)
    b1T = ((b1 - run_mean) * scale + beta).reshape(HIDDEN, 1)       # [256, 1]
    w2T = jnp.zeros((OUT_PAD, HIDDEN), jnp.float32).at[:N_ACTIONS, :].set(w2)
    b2T = jnp.zeros((OUT_PAD, 1), jnp.float32).at[:N_ACTIONS, 0].set(b2)
    return (w1T, b1T, w2T, b2T)


def dqn_forward(obs, fused_params, *, max_tile=2048):
    """obs: [B, 4] float32. Returns Q-values [B, 2] float32."""
    w1T, b1T, w2T, b2T = fused_params
    B = obs.shape[0]

    # Balanced batch tiles along the lane axis (TB multiple of 128).  Force >= 2
    # grid steps when B > 512 so megacore "parallel" sharding engages on v7x.
    n_tiles = max(1, pl.cdiv(B, max_tile))
    if B > 512 and n_tiles < 2:
        n_tiles = 2
    TB = _round_up(pl.cdiv(B, n_tiles), LANE)
    Bp = TB * n_tiles

    # Transposed, K-padded observation slab: [K_PAD, Bp], zeros in pad region.
    xT = jnp.zeros((K_PAD, Bp), jnp.float32).at[:IN_FEATURES, :B].set(obs.T)

    outT = pl.pallas_call(
        dqn_kernel,
        out_shape=jax.ShapeDtypeStruct((OUT_PAD, Bp), jnp.float32),
        grid_spec=pltpu.PrefetchScalarGridSpec(
            num_scalar_prefetch=0,
            grid=(n_tiles,),
            in_specs=[
                pl.BlockSpec((K_PAD, TB), lambda i: (0, i)),        # xT batch tile
                pl.BlockSpec((HIDDEN, K_PAD), lambda i: (0, 0)),    # w1T (resident)
                pl.BlockSpec((HIDDEN, 1), lambda i: (0, 0)),        # b1T (resident)
                pl.BlockSpec((OUT_PAD, HIDDEN), lambda i: (0, 0)),  # w2T (resident)
                pl.BlockSpec((OUT_PAD, 1), lambda i: (0, 0)),       # b2T (resident)
            ],
            out_specs=pl.BlockSpec((OUT_PAD, TB), lambda i: (0, i)),
        ),
        compiler_params=pltpu.CompilerParams(
            dimension_semantics=("parallel",),
        ),
    )(xT, w1T, b1T, w2T, b2T)

    # Tiny [2, B] slice -> [B, 2] transpose in the wrapper.
    return outT[:N_ACTIONS, :B].T


def init_params(key):
    """Deterministic synthetic parameters matching the PyTorch module shapes.

    BN buffers are made non-trivial so the eval-mode folding is actually
    exercised by the correctness check.
    """
    k1, k2, k3, k4, k5, k6, k7, k8 = jax.random.split(key, 8)
    # fc1: Linear(4, 256)  -> weight [256, 4], bias [256]
    w1 = jax.random.normal(k1, (HIDDEN, IN_FEATURES), jnp.float32) * 0.1
    b1 = jax.random.normal(k2, (HIDDEN,), jnp.float32) * 0.1
    # bn1: BatchNorm1d(256) in eval() mode
    gamma = 1.0 + 0.1 * jax.random.normal(k3, (HIDDEN,), jnp.float32)
    beta = 0.1 * jax.random.normal(k4, (HIDDEN,), jnp.float32)
    run_mean = 0.1 * jax.random.normal(k5, (HIDDEN,), jnp.float32)
    run_var = jax.random.uniform(k6, (HIDDEN,), jnp.float32, 0.5, 1.5)
    # fc2: Linear(256, 2) -> weight [2, 256], bias [2]
    w2 = jax.random.normal(k7, (N_ACTIONS, HIDDEN), jnp.float32) * 0.1
    b2 = jax.random.normal(k8, (N_ACTIONS,), jnp.float32) * 0.1
    return (w1, b1, gamma, beta, run_mean, run_var, w2, b2)


def dqn_reference(obs, params):
    """Plain-JAX reference of the PyTorch forward (for correctness check)."""
    w1, b1, gamma, beta, run_mean, run_var, w2, b2 = params
    h = obs @ w1.T + b1
    h = (h - run_mean) / jnp.sqrt(run_var + BN_EPS) * gamma + beta
    h = jnp.maximum(h, 0.0)
    return h @ w2.T + b2


# TODO(synk): get_action / update (epsilon-greedy sampling, Adam optimizer,
# smooth_l1 training loop) are host-side RL logic, not part of the forward pass.

if __name__ == "__main__":
    key = jax.random.PRNGKey(0)
    k_obs, k_params = jax.random.split(key)

    B = 8  # small batch of CartPole-like observations (4 features each)
    obs = jax.random.normal(k_obs, (B, IN_FEATURES), jnp.float32)
    params = init_params(k_params)

    fused = prepare_params(params)      # one-time prep (hoisted out of hot path)
    q = dqn_forward(obs, fused)
    q = jax.block_until_ready(q)

    q_ref = dqn_reference(obs, params)
    assert q.shape == (B, N_ACTIONS)
    # Tolerance leaves headroom for MXU f32 pass behavior while still catching
    # any real logic error (BN fold, bias, ReLU, transposes).
    assert jnp.allclose(q, q_ref, atol=5e-3, rtol=5e-3), float(
        jnp.max(jnp.abs(q - q_ref)))

    print("KERNEL_OK")
</pallas_src>

<mosaic_0001>
module attributes {stable_mosaic.version = 11 : i64} {
  func.func @dqn_kernel(%arg0: i32, %arg1: memref<8x128xf32, #tpu.memory_space<vmem>>, %arg2: memref<256x8xf32, #tpu.memory_space<vmem>>, %arg3: memref<256x1xf32, #tpu.memory_space<vmem>>, %arg4: memref<8x256xf32, #tpu.memory_space<vmem>>, %arg5: memref<8x1xf32, #tpu.memory_space<vmem>>, %arg6: memref<8x128xf32, #tpu.memory_space<vmem>>) attributes {dimension_semantics = [#tpu.dimension_semantics<parallel>], iteration_bounds = array<i64: 1>, scalar_prefetch = 0 : i64, scratch_operands = 0 : i64, tpu.core_type = #tpu.core_type<tc>, window_params = [{transform_indices = @transform_0, window_bounds = array<i64: 8, 128>}, {pipeline_mode = #tpu.pipeline_mode<synchronous>, transform_indices = @transform_1, window_bounds = array<i64: 256, 8>}, {pipeline_mode = #tpu.pipeline_mode<synchronous>, transform_indices = @transform_2, window_bounds = array<i64: 256, 1>}, {pipeline_mode = #tpu.pipeline_mode<synchronous>, transform_indices = @transform_3, window_bounds = array<i64: 8, 256>}, {pipeline_mode = #tpu.pipeline_mode<synchronous>, transform_indices = @transform_4, window_bounds = array<i64: 8, 1>}, {transform_indices = @transform_5, window_bounds = array<i64: 8, 128>}]} {
    %c0 = arith.constant 0 : index
    %c0_0 = arith.constant 0 : index
    %0 = vector.load %arg2[%c0, %c0_0] : memref<256x8xf32, #tpu.memory_space<vmem>>, vector<256x8xf32>
    %c0_1 = arith.constant 0 : index
    %c0_2 = arith.constant 0 : index
    %1 = vector.load %arg1[%c0_1, %c0_2] : memref<8x128xf32, #tpu.memory_space<vmem>>, vector<8x128xf32>
    %cst = arith.constant dense<0.000000e+00> : vector<256x128xf32>
    %2 = tpu.matmul %0, %1, %cst {dimension_numbers = #tpu.dot_dimension_numbers<[1], [0], [0], [1], [0, 0, 1, 1], [], []>} : vector<256x8xf32>, vector<8x128xf32>, vector<256x128xf32> -> vector<256x128xf32>
    %c0_3 = arith.constant 0 : index
    %c0_4 = arith.constant 0 : index
    %3 = vector.load %arg3[%c0_3, %c0_4] : memref<256x1xf32, #tpu.memory_space<vmem>>, vector<256x1xf32>
    %4 = vector.broadcast %3 : vector<256x1xf32> to vector<256x128xf32>
    %5 = arith.addf %2, %4 : vector<256x128xf32>
    %cst_5 = arith.constant 0.000000e+00 : f32
    %6 = vector.broadcast %cst_5 : f32 to vector<256x128xf32>
    %7 = arith.maximumf %5, %6 : vector<256x128xf32>
    %c0_6 = arith.constant 0 : index
    %c0_7 = arith.constant 0 : index
    %8 = vector.load %arg4[%c0_6, %c0_7] : memref<8x256xf32, #tpu.memory_space<vmem>>, vector<8x256xf32>
    %cst_8 = arith.constant dense<0.000000e+00> : vector<8x128xf32>
    %9 = tpu.matmul %8, %7, %cst_8 {dimension_numbers = #tpu.dot_dimension_numbers<[1], [0], [0], [1], [0, 0, 1, 1], [], []>} : vector<8x256xf32>, vector<256x128xf32>, vector<8x128xf32> -> vector<8x128xf32>
    %c0_9 = arith.constant 0 : index
    %c0_10 = arith.constant 0 : index
    %10 = vector.load %arg5[%c0_9, %c0_10] : memref<8x1xf32, #tpu.memory_space<vmem>>, vector<8x1xf32>
    %11 = vector.broadcast %10 : vector<8x1xf32> to vector<8x128xf32>
    %12 = arith.addf %9, %11 : vector<8x128xf32>
    %c0_11 = arith.constant 0 : index
    %c0_12 = arith.constant 0 : index
    %13 = vector.load %arg6[%c0_11, %c0_12] : memref<8x128xf32, #tpu.memory_space<vmem>>, vector<8x128xf32>
    tpu.vector_store %arg6[%c0_11, %c0_12], %12 {strides = array<i32>} : memref<8x128xf32, #tpu.memory_space<vmem>>, vector<8x128xf32>,
    return
  }
  func.func @transform_0(%arg0: i32) -> (i32, i32) {
    %c0_i32 = arith.constant 0 : i32
    %c0_i32_0 = arith.constant 0 : i32
    return %c0_i32, %arg0 : i32, i32
  }
  func.func @transform_1(%arg0: i32) -> (i32, i32) {
    %c0_i32 = arith.constant 0 : i32
    %c0_i32_0 = arith.constant 0 : i32
    %c0_i32_1 = arith.constant 0 : i32
    return %c0_i32, %c0_i32_0 : i32, i32
  }
  func.func @transform_2(%arg0: i32) -> (i32, i32) {
    %c0_i32 = arith.constant 0 : i32
    %c0_i32_0 = arith.constant 0 : i32
    %c0_i32_1 = arith.constant 0 : i32
    return %c0_i32, %c0_i32_0 : i32, i32
  }
  func.func @transform_3(%arg0: i32) -> (i32, i32) {
    %c0_i32 = arith.constant 0 : i32
    %c0_i32_0 = arith.constant 0 : i32
    %c0_i32_1 = arith.constant 0 : i32
    return %c0_i32, %c0_i32_0 : i32, i32
  }
  func.func @transform_4(%arg0: i32) -> (i32, i32) {
    %c0_i32 = arith.constant 0 : i32
    %c0_i32_0 = arith.constant 0 : i32
    %c0_i32_1 = arith.constant 0 : i32
    return %c0_i32, %c0_i32_0 : i32, i32
  }
  func.func @transform_5(%arg0: i32) -> (i32, i32) {
    %c0_i32 = arith.constant 0 : i32
    %c0_i32_0 = arith.constant 0 : i32
    return %c0_i32, %arg0 : i32, i32
  }
}

</mosaic_0001>

<llo_original>
// kernel: tpu_custom_call.1
$region0: #{tpu_custom_call.1}
  #allocation0 [shape = 'u32[]', space=smem, size = 0x4, offset = 0x4, fixed_abs, tag = 'smem constant byte address 0x4 - core index']
  #allocation1 [shape = 'u32[144,128]{1,0:T(1,128)}', space=vmem, size = 0x12000, scoped, tag = 'internal scratch']
  %s0 = inlined_call_operand.vmem [shape: f32[8,128], index: 0, kind: input, shape index: {}]
  %s1 = inlined_call_operand.vmem [shape: f32[256,8], index: 1, kind: input, shape index: {}]
  %s2 = inlined_call_operand.vmem [shape: f32[256,1], index: 2, kind: input, shape index: {}]
  %s3 = inlined_call_operand.vmem [shape: f32[8,256], index: 3, kind: input, shape index: {}]
  %s4 = inlined_call_operand.vmem [shape: f32[8,1], index: 4, kind: input, shape index: {}]
  %s5 = inlined_call_operand.hbm [shape: f32[8,128], index: 5, kind: output, shape index: {}]
  %s6 = sld [smem:[#allocation0]]
  $region30: #{tpu_custom_call.1} parent=0
    _
  %s8 = ssub.s32 1, %s6
  %s9 = scalar_select 0, %s8, %s6
  $region1: #{tpu_custom_call.1} parent=0
    #allocation2 [shape = 'u8[4096]{0}', space=vmem, size = 0x1000, scoped, tag = 'output window, operand 0, single buffered']
    #allocation3 [shape = 's32[1]{0}', space=sflag, size = 0x4, scoped, tag = 'scoped memory for tpu_custom_call.1']
    %10 = vsyncpa [#allocation3], 0
    // Predicated region
    $region2: #{tpu_custom_call.1} parent=1 // pred_check
      _
    $region3: #{tpu_custom_call.1} parent=1 // pred_check_branch
      %12 = sbr.rel (0) target = $region5
    $region4: #{tpu_custom_call.1} parent=1 // pred_region
      _
    $region5: #{tpu_custom_call.1} parent=1 // pred_fallthru
      _
    // Predicated region
    $region6: #{tpu_custom_call.1} parent=1 // pred_check
      _
    $region7: #{tpu_custom_call.1} parent=1 // pred_check_branch
      %14 = sbr.rel (0) target = $region9
    $region8: #{tpu_custom_call.1} parent=1 // pred_region
      _
    $region9: #{tpu_custom_call.1} parent=1 // pred_fallthru
      _
    // Predicated region
    $region10: #{tpu_custom_call.1} parent=1 // pred_check
      _
    $region11: #{tpu_custom_call.1} parent=1 // pred_check_branch
      %16 = sbr.rel (0) target = $region13
    $region12: #{tpu_custom_call.1} parent=1 // pred_region
      _
    $region13: #{tpu_custom_call.1} parent=1 // pred_fallthru
      _
    // Predicated region
    $region14: #{tpu_custom_call.1} parent=1 // pred_check
      _
    $region15: #{tpu_custom_call.1} parent=1 // pred_check_branch
      %18 = sbr.rel (0) target = $region17
    $region16: #{tpu_custom_call.1} parent=1 // pred_region
      _
    $region17: #{tpu_custom_call.1} parent=1 // pred_fallthru
      _
    // Predicated region
    $region18: #{tpu_custom_call.1} parent=1 // pred_check
      _
    $region19: #{tpu_custom_call.1} parent=1 // pred_check_branch
      %20 = sbr.rel (0) target = $region21
    $region20: #{tpu_custom_call.1} parent=1 // pred_region
      _
    $region21: #{tpu_custom_call.1} parent=1 // pred_fallthru
      _
    %v21 = vld [vmem:[%s1] sm:$0xff]
    %v22 = vld [vmem:[%s1 + $0x8] sm:$0xff]
    %v23 = vld [vmem:[%s1 + $0x10] sm:$0xff]
    %v24 = vld [vmem:[%s1 + $0x18] sm:$0xff]
    %v25 = vld [vmem:[%s1 + $0x20] sm:$0xff]
    %v26 = vld [vmem:[%s1 + $0x28] sm:$0xff]
    %v27 = vld [vmem:[%s1 + $0x30] sm:$0xff]
    %v28 = vld [vmem:[%s1 + $0x38] sm:$0xff]
    %v29 = vld [vmem:[%s1 + $0x40] sm:$0xff]
    %v30 = vld [vmem:[%s1 + $0x48] sm:$0xff]
    %v31 = vld [vmem:[%s1 + $0x50] sm:$0xff]
    %v32 = vld [vmem:[%s1 + $0x58] sm:$0xff]
    %v33 = vld [vmem:[%s1 + $0x60] sm:$0xff]
    %v34 = vld [vmem:[%s1 + $0x68] sm:$0xff]
    %v35 = vld [vmem:[%s1 + $0x70] sm:$0xff]
    %v36 = vld [vmem:[%s1 + $0x78] sm:$0xff]
    %v37 = vld [vmem:[%s1 + $0x80] sm:$0xff]
    %v38 = vld [vmem:[%s1 + $0x88] sm:$0xff]
    %v39 = vld [vmem:[%s1 + $0x90] sm:$0xff]
    %v40 = vld [vmem:[%s1 + $0x98] sm:$0xff]
    %v41 = vld [vmem:[%s1 + $0xa0] sm:$0xff]
    %v42 = vld [vmem:[%s1 + $0xa8] sm:$0xff]
    %v43 = vld [vmem:[%s1 + $0xb0] sm:$0xff]
    %v44 = vld [vmem:[%s1 + $0xb8] sm:$0xff]
    %v45 = vld [vmem:[%s1 + $0xc0] sm:$0xff]
    %v46 = vld [vmem:[%s1 + $0xc8] sm:$0xff]
    %v47 = vld [vmem:[%s1 + $0xd0] sm:$0xff]
    %v48 = vld [vmem:[%s1 + $0xd8] sm:$0xff]
    %v49 = vld [vmem:[%s1 + $0xe0] sm:$0xff]
    %v50 = vld [vmem:[%s1 + $0xe8] sm:$0xff]
    %v51 = vld [vmem:[%s1 + $0xf0] sm:$0xff]
    %v52 = vld [vmem:[%s1 + $0xf8] sm:$0xff]
    %v53 = vld [vmem:[%s0] sm:$0xff]
    %v54 = vld [vmem:[%s2] sm:$0xff]
    %v55 = vld [vmem:[%s2 + $0x8] sm:$0xff]
    %v56 = vld [vmem:[%s2 + $0x10] sm:$0xff]
    %v57 = vld [vmem:[%s2 + $0x18] sm:$0xff]
    %v58 = vld [vmem:[%s2 + $0x20] sm:$0xff]
    %v59 = vld [vmem:[%s2 + $0x28] sm:$0xff]
    %v60 = vld [vmem:[%s2 + $0x30] sm:$0xff]
    %v61 = vld [vmem:[%s2 + $0x38] sm:$0xff]
    %v62 = vld [vmem:[%s2 + $0x40] sm:$0xff]
    %v63 = vld [vmem:[%s2 + $0x48] sm:$0xff]
    %v64 = vld [vmem:[%s2 + $0x50] sm:$0xff]
    %v65 = vld [vmem:[%s2 + $0x58] sm:$0xff]
    %v66 = vld [vmem:[%s2 + $0x60] sm:$0xff]
    %v67 = vld [vmem:[%s2 + $0x68] sm:$0xff]
    %v68 = vld [vmem:[%s2 + $0x70] sm:$0xff]
    %v69 = vld [vmem:[%s2 + $0x78] sm:$0xff]
    %v70 = vld [vmem:[%s2 + $0x80] sm:$0xff]
    %v71 = vld [vmem:[%s2 + $0x88] sm:$0xff]
    %v72 = vld [vmem:[%s2 + $0x90] sm:$0xff]
    %v73 = vld [vmem:[%s2 + $0x98] sm:$0xff]
    %v74 = vld [vmem:[%s2 + $0xa0] sm:$0xff]
    %v75 = vld [vmem:[%s2 + $0xa8] sm:$0xff]
    %v76 = vld [vmem:[%s2 + $0xb0] sm:$0xff]
    %v77 = vld [vmem:[%s2 + $0xb8] sm:$0xff]
    %v78 = vld [vmem:[%s2 + $0xc0] sm:$0xff]
    %v79 = vld [vmem:[%s2 + $0xc8] sm:$0xff]
    %v80 = vld [vmem:[%s2 + $0xd0] sm:$0xff]
    %v81 = vld [vmem:[%s2 + $0xd8] sm:$0xff]
    %v82 = vld [vmem:[%s2 + $0xe0] sm:$0xff]
    %v83 = vld [vmem:[%s2 + $0xe8] sm:$0xff]
    %v84 = vld [vmem:[%s2 + $0xf0] sm:$0xff]
    %v85 = vld [vmem:[%s2 + $0xf8] sm:$0xff]
    %87 = vset.pattern.permute.xlu0 0
    %88 = vperm.xlu0 %87, %v54
    %v89 = vpop.permute.xlu0 %88
    %92 = vset.pattern.permute.xlu0 0
    %93 = vperm.xlu0 %92, %v55
    %v94 = vpop.permute.xlu0 %93
    %97 = vset.pattern.permute.xlu0 0
    %98 = vperm.xlu0 %97, %v56
    %v99 = vpop.permute.xlu0 %98
    %102 = vset.pattern.permute.xlu0 0
    %103 = vperm.xlu0 %102, %v57
    %v104 = vpop.permute.xlu0 %103
    %107 = vset.pattern.permute.xlu0 0
    %108 = vperm.xlu0 %107, %v58
    %v109 = vpop.permute.xlu0 %108
    %112 = vset.pattern.permute.xlu0 0
    %113 = vperm.xlu0 %112, %v59
    %v114 = vpop.permute.xlu0 %113
    %117 = vset.pattern.permute.xlu0 0
    %118 = vperm.xlu0 %117, %v60
    %v119 = vpop.permute.xlu0 %118
    %122 = vset.pattern.permute.xlu0 0
    %123 = vperm.xlu0 %122, %v61
    %v124 = vpop.permute.xlu0 %123
    %127 = vset.pattern.permute.xlu0 0
    %128 = vperm.xlu0 %127, %v62
    %v129 = vpop.permute.xlu0 %128
    %132 = vset.pattern.permute.xlu0 0
    %133 = vperm.xlu0 %132, %v63
    %v134 = vpop.permute.xlu0 %133
    %137 = vset.pattern.permute.xlu0 0
    %138 = vperm.xlu0 %137, %v64
    %v139 = vpop.permute.xlu0 %138
    %142 = vset.pattern.permute.xlu0 0
    %143 = vperm.xlu0 %142, %v65
    %v144 = vpop.permute.xlu0 %143
    %147 = vset.pattern.permute.xlu0 0
    %148 = vperm.xlu0 %147, %v66
    %v149 = vpop.permute.xlu0 %148
    %152 = vset.pattern.permute.xlu0 0
    %153 = vperm.xlu0 %152, %v67
    %v154 = vpop.permute.xlu0 %153
    %157 = vset.pattern.permute.xlu0 0
    %158 = vperm.xlu0 %157, %v68
    %v159 = vpop.permute.xlu0 %158
    %162 = vset.pattern.permute.xlu0 0
    %163 = vperm.xlu0 %162, %v69
    %v164 = vpop.permute.xlu0 %163
    %167 = vset.pattern.permute.xlu0 0
    %168 = vperm.xlu0 %167, %v70
    %v169 = vpop.permute.xlu0 %168
    %172 = vset.pattern.permute.xlu0 0
    %173 = vperm.xlu0 %172, %v71
    %v174 = vpop.permute.xlu0 %173
    %177 = vset.pattern.permute.xlu0 0
    %178 = vperm.xlu0 %177, %v72
    %v179 = vpop.permute.xlu0 %178
    %182 = vset.pattern.permute.xlu0 0
    %183 = vperm.xlu0 %182, %v73
    %v184 = vpop.permute.xlu0 %183
    %187 = vset.pattern.permute.xlu0 0
    %188 = vperm.xlu0 %187, %v74
    %v189 = vpop.permute.xlu0 %188
    %192 = vset.pattern.permute.xlu0 0
    %193 = vperm.xlu0 %192, %v75
    %v194 = vpop.permute.xlu0 %193
    %197 = vset.pattern.permute.xlu0 0
    %198 = vperm.xlu0 %197, %v76
    %v199 = vpop.permute.xlu0 %198
    %202 = vset.pattern.permute.xlu0 0
    %203 = vperm.xlu0 %202, %v77
    %v204 = vpop.permute.xlu0 %203
    %207 = vset.pattern.permute.xlu0 0
    %208 = vperm.xlu0 %207, %v78
    %v209 = vpop.permute.xlu0 %208
    %212 = vset.pattern.permute.xlu0 0
    %213 = vperm.xlu0 %212, %v79
    %v214 = vpop.permute.xlu0 %213
    %217 = vset.pattern.permute.xlu0 0
    %218 = vperm.xlu0 %217, %v80
    %v219 = vpop.permute.xlu0 %218
    %222 = vset.pattern.permute.xlu0 0
    %223 = vperm.xlu0 %222, %v81
    %v224 = vpop.permute.xlu0 %223
    %227 = vset.pattern.permute.xlu0 0
    %228 = vperm.xlu0 %227, %v82
    %v229 = vpop.permute.xlu0 %228
    %232 = vset.pattern.permute.xlu0 0
    %233 = vperm.xlu0 %232, %v83
    %v234 = vpop.permute.xlu0 %233
    %237 = vset.pattern.permute.xlu0 0
    %238 = vperm.xlu0 %237, %v84
    %v239 = vpop.permute.xlu0 %238
    %242 = vset.pattern.permute.xlu0 0
    %243 = vperm.xlu0 %242, %v85
    %v244 = vpop.permute.xlu0 %243
    %vm246 = vcmask 64512
    %v248 = vsel %vm246, %v21, 0
    %v251 = vsel %vm246, %v22, 0
    %v254 = vsel %vm246, %v23, 0
    %v257 = vsel %vm246, %v24, 0
    %v260 = vsel %vm246, %v25, 0
    %v263 = vsel %vm246, %v26, 0
    %v266 = vsel %vm246, %v27, 0
    %v269 = vsel %vm246, %v28, 0
    %v272 = vsel %vm246, %v29, 0
    %v275 = vsel %vm246, %v30, 0
    %v278 = vsel %vm246, %v31, 0
    %v281 = vsel %vm246, %v32, 0
    %v284 = vsel %vm246, %v33, 0
    %v287 = vsel %vm246, %v34, 0
    %v290 = vsel %vm246, %v35, 0
    %v293 = vsel %vm246, %v36, 0
    %v296 = vsel %vm246, %v37, 0
    %v299 = vsel %vm246, %v38, 0
    %v302 = vsel %vm246, %v39, 0
    %v305 = vsel %vm246, %v40, 0
    %v308 = vsel %vm246, %v41, 0
    %v311 = vsel %vm246, %v42, 0
    %v314 = vsel %vm246, %v43, 0
    %v317 = vsel %vm246, %v44, 0
    %v320 = vsel %vm246, %v45, 0
    %v323 = vsel %vm246, %v46, 0
    %v326 = vsel %vm246, %v47, 0
    %v329 = vsel %vm246, %v48, 0
    %v332 = vsel %vm246, %v49, 0
    %v335 = vsel %vm246, %v50, 0
    %v338 = vsel %vm246, %v51, 0
    %v341 = vsel %vm246, %v52, 0
    %343 = vmatprep.subr.mxu0 0.0
    %344 = vmatpush1.msra.mxu0 %v53
    %345 = vmatprep.subr.mxu0 0.0
    %346 = vmatpush1.msra.mxu0 0.0
    %347 = vmatprep.subr.mxu0 0.0
    %348 = vmatpush1.msra.mxu0 0.0
    %349 = vmatprep.subr.mxu0 0.0
    %350 = vmatpush1.msra.mxu0 0.0
    %351 = vmatprep.subr.mxu0 0.0
    %352 = vmatpush1.msra.mxu0 0.0
    %353 = vmatprep.subr.mxu0 0.0
    %354 = vmatpush1.msra.mxu0 0.0
    %355 = vmatprep.subr.mxu0 0.0
    %356 = vmatpush1.msra.mxu0 0.0
    %357 = vmatprep.subr.mxu0 0.0
    %358 = vmatpush1.msra.mxu0 0.0
    %359 = vmatprep.subr.mxu0 0.0
    %360 = vmatpush1.msra.mxu0 0.0
    %361 = vmatprep.subr.mxu0 0.0
    %362 = vmatpush1.msra.mxu0 0.0
    %363 = vmatprep.subr.mxu0 0.0
    %364 = vmatpush1.msra.mxu0 0.0
    %365 = vmatprep.subr.mxu0 0.0
    %366 = vmatpush1.msra.mxu0 0.0
    %367 = vmatprep.subr.mxu0 0.0
    %368 = vmatpush1.msra.mxu0 0.0
    %369 = vmatprep.subr.mxu0 0.0
    %370 = vmatpush1.msra.mxu0 0.0
    %371 = vmatprep.subr.mxu0 0.0
    %372 = vmatpush1.msra.mxu0 0.0
    %373 = vmatprep.subr.mxu0 0.0
    %374 = vmatpush1.msra.mxu0 0.0
    %375 = vmatprep.subr.mxu0 0.0
    %376 = vmatpush1.msra.mxu0 0.0
    %377 = vmatprep.subr.mxu0 0.0
    %378 = vmatpush1.msra.mxu0 0.0
    %379 = vmatprep.subr.mxu0 0.0
    %380 = vmatpush1.msra.mxu0 0.0
    %381 = vmatprep.subr.mxu0 0.0
    %382 = vmatpush1.msra.mxu0 0.0
    %383 = vmatprep.subr.mxu0 0.0
    %384 = vmatpush1.msra.mxu0 0.0
    %385 = vmatprep.subr.mxu0 0.0
    %386 = vmatpush1.msra.mxu0 0.0
    %387 = vmatprep.subr.mxu0 0.0
    %388 = vmatpush1.msra.mxu0 0.0
    %389 = vmatprep.subr.mxu0 0.0
    %390 = vmatpush1.msra.mxu0 0.0
    %391 = vmatprep.subr.mxu0 0.0
    %392 = vmatpush1.msra.mxu0 0.0
    %393 = vmatprep.subr.mxu0 0.0
    %394 = vmatpush1.msra.mxu0 0.0
    %395 = vmatprep.subr.mxu0 0.0
    %396 = vmatpush1.msra.mxu0 0.0
    %397 = vmatprep.subr.mxu0 0.0
    %398 = vmatpush1.msra.mxu0 0.0
    %399 = vmatprep.subr.mxu0 0.0
    %400 = vmatpush1.msra.mxu0 0.0
    %401 = vmatprep.subr.mxu0 0.0
    %402 = vmatpush1.msra.mxu0 0.0
    %403 = vmatprep.subr.mxu0 0.0
    %404 = vmatpush1.msra.mxu0 0.0
    %405 = vmatprep.subr.mxu0 0.0
    %406 = vmatpush1.msra.mxu0 0.0
    %407 = vmatprep.mubr.f32.mxu0 0.0
    %408 = vmatmul.mubr.f32.gmra.mrb[0].mxu0 %v248
    %v409 = vpop.f32.mrb[0].mxu0
    %v410 = vadd.f32 %v89, %v409
    %v411 = vpop.f32.mrb[0].mxu0
    %412 = vmatprep.mubr.f32.mxu0 0.0
    %413 = vmatmul.mubr.f32.gmra.mrb[0].mxu0 %v251
    %v414 = vpop.f32.mrb[0].mxu0
    %v415 = vadd.f32 %v94, %v414
    %v416 = vpop.f32.mrb[0].mxu0
    %417 = vmatprep.mubr.f32.mxu0 0.0
    %418 = vmatmul.mubr.f32.gmra.mrb[0].mxu0 %v254
    %v419 = vpop.f32.mrb[0].mxu0
    %v420 = vadd.f32 %v99, %v419
    %v421 = vpop.f32.mrb[0].mxu0
    %422 = vmatprep.mubr.f32.mxu0 0.0
    %423 = vmatmul.mubr.f32.gmra.mrb[0].mxu0 %v257
    %v424 = vpop.f32.mrb[0].mxu0
    %v425 = vadd.f32 %v104, %v424
    %v426 = vpop.f32.mrb[0].mxu0
    %427 = vmatprep.mubr.f32.mxu0 0.0
    %428 = vmatmul.mubr.f32.gmra.mrb[0].mxu0 %v260
    %v429 = vpop.f32.mrb[0].mxu0
    %v430 = vadd.f32 %v109, %v429
    %v431 = vpop.f32.mrb[0].mxu0
    %432 = vmatprep.mubr.f32.mxu0 0.0
    %433 = vmatmul.mubr.f32.gmra.mrb[0].mxu0 %v263
    %v434 = vpop.f32.mrb[0].mxu0
    %v435 = vadd.f32 %v114, %v434
    %v436 = vpop.f32.mrb[0].mxu0
    %437 = vmatprep.mubr.f32.mxu0 0.0
    %438 = vmatmul.mubr.f32.gmra.mrb[0].mxu0 %v266
    %v439 = vpop.f32.mrb[0].mxu0
    %v440 = vadd.f32 %v119, %v439
    %v441 = vpop.f32.mrb[0].mxu0
    %442 = vmatprep.mubr.f32.mxu0 0.0
    %443 = vmatmul.mubr.f32.gmra.mrb[0].mxu0 %v269
    %v444 = vpop.f32.mrb[0].mxu0
    %v445 = vadd.f32 %v124, %v444
    %v446 = vpop.f32.mrb[0].mxu0
    %447 = vmatprep.mubr.f32.mxu0 0.0
    %448 = vmatmul.mubr.f32.gmra.mrb[0].mxu0 %v272
    %v449 = vpop.f32.mrb[0].mxu0
    %v450 = vadd.f32 %v129, %v449
    %v451 = vpop.f32.mrb[0].mxu0
    %452 = vmatprep.mubr.f32.mxu0 0.0
    %453 = vmatmul.mubr.f32.gmra.mrb[0].mxu0 %v275
    %v454 = vpop.f32.mrb[0].mxu0
    %v455 = vadd.f32 %v134, %v454
    %v456 = vpop.f32.mrb[0].mxu0
    %457 = vmatprep.mubr.f32.mxu0 0.0
    %458 = vmatmul.mubr.f32.gmra.mrb[0].mxu0 %v278
    %v459 = vpop.f32.mrb[0].mxu0
    %v460 = vadd.f32 %v139, %v459
    %v461 = vpop.f32.mrb[0].mxu0
    %462 = vmatprep.mubr.f32.mxu0 0.0
    %463 = vmatmul.mubr.f32.gmra.mrb[0].mxu0 %v281
    %v464 = vpop.f32.mrb[0].mxu0
    %v465 = vadd.f32 %v144, %v464
    %v466 = vpop.f32.mrb[0].mxu0
    %467 = vmatprep.mubr.f32.mxu0 0.0
    %468 = vmatmul.mubr.f32.gmra.mrb[0].mxu0 %v284
    %v469 = vpop.f32.mrb[0].mxu0
    %v470 = vadd.f32 %v149, %v469
    %v471 = vpop.f32.mrb[0].mxu0
    %472 = vmatprep.mubr.f32.mxu0 0.0
    %473 = vmatmul.mubr.f32.gmra.mrb[0].mxu0 %v287
    %v474 = vpop.f32.mrb[0].mxu0
    %v475 = vadd.f32 %v154, %v474
    %v476 = vpop.f32.mrb[0].mxu0
    %477 = vmatprep.mubr.f32.mxu0 0.0
    %478 = vmatmul.mubr.f32.gmra.mrb[0].mxu0 %v290
    %v479 = vpop.f32.mrb[0].mxu0
    %v480 = vadd.f32 %v159, %v479
    %v481 = vpop.f32.mrb[0].mxu0
    %482 = vmatprep.mubr.f32.mxu0 0.0
    %483 = vmatmul.mubr.f32.gmra.mrb[0].mxu0 %v293
    %v484 = vpop.f32.mrb[0].mxu0
    %v485 = vadd.f32 %v164, %v484
    %v486 = vpop.f32.mrb[0].mxu0
    %487 = vmatprep.mubr.f32.mxu0 0.0
    %488 = vmatmul.mubr.f32.gmra.mrb[0].mxu0 %v296
    %v489 = vpop.f32.mrb[0].mxu0
    %v490 = vadd.f32 %v169, %v489
    %v491 = vpop.f32.mrb[0].mxu0
    %492 = vmatprep.mubr.f32.mxu0 0.0
    %493 = vmatmul.mubr.f32.gmra.mrb[0].mxu0 %v299
    %v494 = vpop.f32.mrb[0].mxu0
    %v495 = vadd.f32 %v174, %v494
    %v496 = vpop.f32.mrb[0].mxu0
    %497 = vmatprep.mubr.f32.mxu0 0.0
    %498 = vmatmul.mubr.f32.gmra.mrb[0].mxu0 %v302
    %v499 = vpop.f32.mrb[0].mxu0
    %v500 = vadd.f32 %v179, %v499
    %v501 = vpop.f32.mrb[0].mxu0
    %502 = vmatprep.mubr.f32.mxu0 0.0
    %503 = vmatmul.mubr.f32.gmra.mrb[0].mxu0 %v305
    %v504 = vpop.f32.mrb[0].mxu0
    %v505 = vadd.f32 %v184, %v504
    %v506 = vpop.f32.mrb[0].mxu0
    %507 = vmatprep.mubr.f32.mxu0 0.0
    %508 = vmatmul.mubr.f32.gmra.mrb[0].mxu0 %v308
    %v509 = vpop.f32.mrb[0].mxu0
    %v510 = vadd.f32 %v189, %v509
    %v511 = vpop.f32.mrb[0].mxu0
    %512 = vmatprep.mubr.f32.mxu0 0.0
    %513 = vmatmul.mubr.f32.gmra.mrb[0].mxu0 %v311
    %v514 = vpop.f32.mrb[0].mxu0
    %v515 = vadd.f32 %v194, %v514
    %v516 = vpop.f32.mrb[0].mxu0
    %517 = vmatprep.mubr.f32.mxu0 0.0
    %518 = vmatmul.mubr.f32.gmra.mrb[0].mxu0 %v314
    %v519 = vpop.f32.mrb[0].mxu0
    %v520 = vadd.f32 %v199, %v519
    %v521 = vpop.f32.mrb[0].mxu0
    %522 = vmatprep.mubr.f32.mxu0 0.0
    %523 = vmatmul.mubr.f32.gmra.mrb[0].mxu0 %v317
    %v524 = vpop.f32.mrb[0].mxu0
    %v525 = vadd.f32 %v204, %v524
    %v526 = vpop.f32.mrb[0].mxu0
    %527 = vmatprep.mubr.f32.mxu0 0.0
    %528 = vmatmul.mubr.f32.gmra.mrb[0].mxu0 %v320
    %v529 = vpop.f32.mrb[0].mxu0
    %v530 = vadd.f32 %v209, %v529
    %v531 = vpop.f32.mrb[0].mxu0
    %532 = vmatprep.mubr.f32.mxu0 0.0
    %533 = vmatmul.mubr.f32.gmra.mrb[0].mxu0 %v323
    %v534 = vpop.f32.mrb[0].mxu0
    %v535 = vadd.f32 %v214, %v534
    %v536 = vpop.f32.mrb[0].mxu0
    %537 = vmatprep.mubr.f32.mxu0 0.0
    %538 = vmatmul.mubr.f32.gmra.mrb[0].mxu0 %v326
    %v539 = vpop.f32.mrb[0].mxu0
    %v540 = vadd.f32 %v219, %v539
    %v541 = vpop.f32.mrb[0].mxu0
    %542 = vmatprep.mubr.f32.mxu0 0.0
    %543 = vmatmul.mubr.f32.gmra.mrb[0].mxu0 %v329
    %v544 = vpop.f32.mrb[0].mxu0
    %v545 = vadd.f32 %v224, %v544
    %v546 = vpop.f32.mrb[0].mxu0
    %547 = vmatprep.mubr.f32.mxu0 0.0
    %548 = vmatmul.mubr.f32.gmra.mrb[0].mxu0 %v332
    %v549 = vpop.f32.mrb[0].mxu0
    %v550 = vadd.f32 %v229, %v549
    %v551 = vpop.f32.mrb[0].mxu0
    %552 = vmatprep.mubr.f32.mxu0 0.0
    %553 = vmatmul.mubr.f32.gmra.mrb[0].mxu0 %v335
    %v554 = vpop.f32.mrb[0].mxu0
    %v555 = vadd.f32 %v234, %v554
    %v556 = vpop.f32.mrb[0].mxu0
    %557 = vmatprep.mubr.f32.mxu0 0.0
    %558 = vmatmul.mubr.f32.gmra.mrb[0].mxu0 %v338
    %v559 = vpop.f32.mrb[0].mxu0
    %v560 = vadd.f32 %v239, %v559
    %v561 = vpop.f32.mrb[0].mxu0
    %562 = vmatprep.mubr.f32.mxu0 0.0
    %563 = vmatmul.mubr.f32.gmra.mrb[0].mxu0 %v341
    %v564 = vpop.f32.mrb[0].mxu0
    %v565 = vadd.f32 %v244, %v564
    %v566 = vpop.f32.mrb[0].mxu0
    %567 = vdwg.mxu0
    %v568 = vmax.f32 %v410, 0.0
    %v569 = vmax.f32 %v415, 0.0
    %v570 = vmax.f32 %v420, 0.0
    %v571 = vmax.f32 %v425, 0.0
    %v572 = vmax.f32 %v430, 0.0
    %v573 = vmax.f32 %v435, 0.0
    %v574 = vmax.f32 %v440, 0.0
    %v575 = vmax.f32 %v445, 0.0
    %v576 = vmax.f32 %v450, 0.0
    %v577 = vmax.f32 %v455, 0.0
    %v578 = vmax.f32 %v460, 0.0
    %v579 = vmax.f32 %v465, 0.0
    %v580 = vmax.f32 %v470, 0.0
    %v581 = vmax.f32 %v475, 0.0
    %v582 = vmax.f32 %v480, 0.0
    %v583 = vmax.f32 %v485, 0.0
    %v584 = vmax.f32 %v490, 0.0
    %v585 = vmax.f32 %v495, 0.0
    %v586 = vmax.f32 %v500, 0.0
    %v587 = vmax.f32 %v505, 0.0
    %v588 = vmax.f32 %v510, 0.0
    %v589 = vmax.f32 %v515, 0.0
    %v590 = vmax.f32 %v520, 0.0
    %v591 = vmax.f32 %v525, 0.0
    %v592 = vmax.f32 %v530, 0.0
    %v593 = vmax.f32 %v535, 0.0
    %v594 = vmax.f32 %v540, 0.0
    %v595 = vmax.f32 %v545, 0.0
    %v596 = vmax.f32 %v550, 0.0
    %v597 = vmax.f32 %v555, 0.0
    %v598 = vmax.f32 %v560, 0.0
    %v599 = vmax.f32 %v565, 0.0
    %v600 = vld [vmem:[%s3] sm:$0xff]
    %v601 = vld [vmem:[%s3 + $0x8] sm:$0xff]
    %v602 = vld [vmem:[%s4] sm:$0xff]
    %604 = vset.pattern.permute.xlu0 0
    %605 = vperm.xlu0 %604, %v602
    %v606 = vpop.permute.xlu0 %605
    %608 = vmatprep.subr.mxu0 0.0
    %609 = vmatpush1.msra.mxu0 %v568
    %610 = vmatprep.subr.mxu0 0.0
    %611 = vmatpush1.msra.mxu0 %v569
    %612 = vmatprep.subr.mxu0 0.0
    %613 = vmatpush1.msra.mxu0 %v570
    %614 = vmatprep.subr.mxu0 0.0
    %615 = vmatpush1.msra.mxu0 %v571
    %616 = vmatprep.subr.mxu0 0.0
    %617 = vmatpush1.msra.mxu0 %v572
    %618 = vmatprep.subr.mxu0 0.0
    %619 = vmatpush1.msra.mxu0 %v573
    %620 = vmatprep.subr.mxu0 0.0
    %621 = vmatpush1.msra.mxu0 %v574
    %622 = vmatprep.subr.mxu0 0.0
    %623 = vmatpush1.msra.mxu0 %v575
    %624 = vmatprep.subr.mxu0 0.0
    %625 = vmatpush1.msra.mxu0 %v576
    %626 = vmatprep.subr.mxu0 0.0
    %627 = vmatpush1.msra.mxu0 %v577
    %628 = vmatprep.subr.mxu0 0.0
    %629 = vmatpush1.msra.mxu0 %v578
    %630 = vmatprep.subr.mxu0 0.0
    %631 = vmatpush1.msra.mxu0 %v579
    %632 = vmatprep.subr.mxu0 0.0
    %633 = vmatpush1.msra.mxu0 %v580
    %634 = vmatprep.subr.mxu0 0.0
    %635 = vmatpush1.msra.mxu0 %v581
    %636 = vmatprep.subr.mxu0 0.0
    %637 = vmatpush1.msra.mxu0 %v582
    %638 = vmatprep.subr.mxu0 0.0
    %639 = vmatpush1.msra.mxu0 %v583
    %640 = vmatprep.subr.mxu0 0.0
    %641 = vmatpush1.msra.mxu0 %v584
    %642 = vmatprep.subr.mxu0 0.0
    %643 = vmatpush1.msra.mxu0 %v585
    %644 = vmatprep.subr.mxu0 0.0
    %645 = vmatpush1.msra.mxu0 %v586
    %646 = vmatprep.subr.mxu0 0.0
    %647 = vmatpush1.msra.mxu0 %v587
    %648 = vmatprep.subr.mxu0 0.0
    %649 = vmatpush1.msra.mxu0 %v588
    %650 = vmatprep.subr.mxu0 0.0
    %651 = vmatpush1.msra.mxu0 %v589
    %652 = vmatprep.subr.mxu0 0.0
    %653 = vmatpush1.msra.mxu0 %v590
    %654 = vmatprep.subr.mxu0 0.0
    %655 = vmatpush1.msra.mxu0 %v591
    %656 = vmatprep.subr.mxu0 0.0
    %657 = vmatpush1.msra.mxu0 %v592
    %658 = vmatprep.subr.mxu0 0.0
    %659 = vmatpush1.msra.mxu0 %v593
    %660 = vmatprep.subr.mxu0 0.0
    %661 = vmatpush1.msra.mxu0 %v594
    %662 = vmatprep.subr.mxu0 0.0
    %663 = vmatpush1.msra.mxu0 %v595
    %664 = vmatprep.subr.mxu0 0.0
    %665 = vmatpush1.msra.mxu0 %v596
    %666 = vmatprep.subr.mxu0 0.0
    %667 = vmatpush1.msra.mxu0 %v597
    %668 = vmatprep.subr.mxu0 0.0
    %669 = vmatpush1.msra.mxu0 %v598
    %670 = vmatprep.subr.mxu0 0.0
    %671 = vmatpush1.msra.mxu0 %v599
    %672 = vmatprep.mubr.f32.mxu0 %v601
    %673 = vmatmul.mubr.f32.gmra.mrb[0].mxu0 %v600
    %v674 = vpop.f32.mrb[0].mxu0
    %v675 = vadd.f32 %v606, %v674
    %v676 = vpop.f32.mrb[0].mxu0
    %677 = vdwg.mxu0
    %678 = vst [vmem:[#allocation2] sm:$0xff] %v675
    // Predicated region
    $region22: #{tpu_custom_call.1} parent=1 // pred_check
      _
    $region23: #{tpu_custom_call.1} parent=1 // pred_check_branch
      %680 = sbr.rel (0) target = $region25
    $region24: #{tpu_custom_call.1} parent=1 // pred_region
      %s682 = ssub.s32 128, 128
      %683 = vsyncadd [#allocation3], %s682
      %s685 = sshll.u32 [#allocation2], 4
      %s686 = int_to_ptr.vmem [resolvable:$true] %s685
      %688 = dma.vmem_to_hbm [thread:$0]  %s686, 128, %s5, [#allocation3]
    $region25: #{tpu_custom_call.1} parent=1 // pred_fallthru
      _
    // Predicated region
    $region26: #{tpu_custom_call.1} parent=1 // pred_check
      _
    $region27: #{tpu_custom_call.1} parent=1 // pred_check_branch
      %690 = sbr.rel (0) target = $region29
    $region28: #{tpu_custom_call.1} parent=1 // pred_region
      %691 = dma.done [#allocation3], 128
    $region29: #{tpu_custom_call.1} parent=1 // pred_fallthru
      _
    %692 = vsyncpa [#allocation3], 1

</llo_original>
